<compile_context>
chip_gen: v6e
topology: v6e:2x2x1
jax: 0.10.0
libtpu: 0.0.40
codegen_flags: <defaults>
</compile_context>

<pallas_src>
import math

import jax
import jax.numpy as jnp
from jax import lax
from jax.experimental import pallas as pl
from jax.experimental.pallas import tpu as pltpu


# ---------------------------------------------------------------------------
# Kernel
# ---------------------------------------------------------------------------
def _make_kernel(n_heads, key_dim, cache_k):
    def kernel(q_ref, h_ref, wq_ref, wk_ref, o_ref, kT_ref, qall_ref):
        # q_ref:    (Tq, D)     current (batch, q-tile)        [batch dim squeezed]
        # h_ref:    (Tg, D)     current (batch, graph-tile)    [resident across q-tiles]
        # wq_ref:   (D, H*Kd)   concatenated query weights (norm_factor folded in)
        # wk_ref:   (D, H*Kd)   concatenated key weights
        # o_ref:    (H, Tq, Tg)
        # kT_ref:   VMEM scratch (H*Kd, Tg) -- K projection stored TRANSPOSED so the
        #           per-head slice is a cheap sublane (row) slice.
        # qall_ref: VMEM scratch (Tq, H*Kd) -- stages the Q projection so only one
        #           (Tq, Tg) compat temp is live at a time in the head loop.

        def project_k():
            # K^T = W_k^T @ h^T : contract D (wk dim 0 with h dim 1) -> (H*Kd, Tg).
            kT_ref[...] = lax.dot_general(
                wk_ref[...],
                h_ref[...],
                dimension_numbers=(((0,), (1,)), ((), ())),
                preferred_element_type=jnp.float32,
            ).astype(kT_ref.dtype)

        if cache_k:
            # INVARIANT: valid only because the q-tile axis is the innermost grid
            # axis and is marked "arbitrary": the cache is filled on the first
            # q-tile of each (batch, graph-tile) and reused for the rest.
            @pl.when(pl.program_id(2) == 0)
            def _():
                project_k()
        else:
            project_k()

        # Q projection for this q-tile (norm_factor already folded into wq).
        qall_ref[...] = jnp.dot(
            q_ref[...], wq_ref[...], preferred_element_type=jnp.float32
        ).astype(qall_ref.dtype)

        # Static head unroll: ref slices per head (sublane slice of cached K^T,
        # lane slice of the fresh Q projection), one MXU matmul per head.
        for head in range(n_heads):
            lo = head * key_dim
            hi = lo + key_dim
            q_h = qall_ref[:, lo:hi]   # (Tq, Kd)
            k_h = kT_ref[lo:hi, :]     # (Kd, Tg)
            o_ref[head] = jnp.dot(
                q_h, k_h, preferred_element_type=jnp.float32
            ).astype(o_ref.dtype)

    return kernel


# ---------------------------------------------------------------------------
# VMEM budget / tile selection
# ---------------------------------------------------------------------------
def _vmem_budget():
    """Generation-aware VMEM limit and tile-selection budget (bytes)."""
    cap = None
    try:
        info = pltpu.get_tpu_info()
        cap = getattr(info, "vmem_capacity_bytes", None)
    except Exception:
        cap = None
    if not cap:
        cap = 64 * 1024 * 1024  # conservative fallback = v7x physical VMEM
    vmem_limit = int(cap * 3 // 4)        # ~96 MiB on v5e/v6e, ~48 MiB on v7x
    tile_budget = int(vmem_limit * 0.85)  # headroom for compiler temporaries
    return vmem_limit, tile_budget


def _tile_candidates(n, cands):
    out = {n}
    for c in cands:
        if c < n and n % c == 0:
            out.add(c)
    return sorted(out, reverse=True)


def _vmem_footprint(tq, tg, d, n_heads, key_dim, in_itemsize):
    """Estimate of per-step VMEM use for a (tq, tg) tile (bytes)."""
    hkd = n_heads * key_dim
    q_blk = 2 * tq * d * in_itemsize            # double-buffered q tile
    h_blk = 2 * tg * d * in_itemsize            # double-buffered h tile
    w_blk = 2 * 2 * d * hkd * in_itemsize       # both weight blocks, double-buffered
    k_scr = hkd * tg * in_itemsize              # transposed K cache scratch
    q_scr = tq * hkd * in_itemsize              # Q projection scratch
    out_blk = 2 * n_heads * tq * tg * 4         # double-buffered f32 output block
    temps = tq * tg * 4 + tq * hkd * 4          # one compat temp + f32 proj temp
    return q_blk + h_blk + w_blk + k_scr + q_scr + out_blk + temps


def _select_tiles(n_query, graph_size, d, n_heads, key_dim, in_itemsize, budget):
    tq_cands = _tile_candidates(n_query, (1024, 512, 256, 128, 64, 32, 16, 8))
    tg_cands = _tile_candidates(graph_size, (2048, 1024, 512, 256, 128))
    best = None
    for tg in tg_cands:
        for tq in tq_cands:
            if _vmem_footprint(tq, tg, d, n_heads, key_dim, in_itemsize) <= budget:
                score = (tq * tg, tg, tq)  # prefer big tiles, tie-break lane dim
                if best is None or score > best[0]:
                    best = (score, tq, tg)
    if best is None:
        return tq_cands[-1], tg_cands[-1]  # smallest legal tiles (best effort)
    return best[1], best[2]


def _check_tile(t, n, mult, name):
    if n % t != 0:
        raise ValueError(f"{name}={t} must divide {n}")
    if t != n and t % mult != 0:
        raise ValueError(f"{name}={t} must be a multiple of {mult} or equal {n}")


# ---------------------------------------------------------------------------
# Wrapper
# ---------------------------------------------------------------------------
def multi_head_compat(q, h, w_query, w_key, *, use_bf16_inputs=False,
                      q_tile=None, g_tile=None):
    """Pallas implementation of MultiHeadCompat.forward.

    q:       (B, Nq, D)
    h:       (B, Ng, D)
    w_query: (H, D, Kd)
    w_key:   (H, D, Kd)
    returns: (H, B, Nq, Ng) float32
    """
    B, Nq, D = q.shape
    _, Ng, Dh = h.shape
    H, _, Kd = w_query.shape
    assert Dh == D
    norm_factor = 1.0 / math.sqrt(Kd)
    HKd = H * Kd

    in_dtype = jnp.bfloat16 if use_bf16_inputs else jnp.float32
    isz = jnp.dtype(in_dtype).itemsize

    # Concatenate per-head weights -> (D, H*Kd). norm_factor is folded into the
    # query weights here (fuses into this tiny transform; removes a per-step
    # (tq, H*Kd) VPU multiply in the kernel).
    wq_all = (jnp.transpose(w_query, (1, 0, 2)).reshape(D, HKd)
              * norm_factor).astype(in_dtype)
    wk_all = jnp.transpose(w_key, (1, 0, 2)).reshape(D, HKd).astype(in_dtype)
    q_in = q.astype(in_dtype)
    h_in = h.astype(in_dtype)

    vmem_limit, tile_budget = _vmem_budget()
    auto_tq, auto_tg = _select_tiles(Nq, Ng, D, H, Kd, isz, tile_budget)
    tq = q_tile if q_tile is not None else auto_tq
    tg = g_tile if g_tile is not None else auto_tg
    _check_tile(tq, Nq, 8, "q_tile")
    _check_tile(tg, Ng, 128, "g_tile")
    nqt, ngt = Nq // tq, Ng // tg

    # Cache the K projection across q-tiles only when it is actually reused and
    # there is enough (batch x graph-tile) parallelism to feed both v7x cores;
    # otherwise recompute it per step so every grid axis can be "parallel".
    cache_k = (nqt > 1) and (B * ngt > 1)
    q_axis_sem = "arbitrary" if cache_k else "parallel"

    flops = int(2 * B * HKd * D * (Nq + Ng) + 2 * B * H * Nq * Ng * Kd)
    bytes_accessed = int(isz * (B * Nq * D + B * Ng * D + 2 * D * HKd)
                         + 4 * H * B * Nq * Ng)

    grid = (B, ngt, nqt)
    out_shape = jax.ShapeDtypeStruct((H, B, Nq, Ng), jnp.float32)

    return pl.pallas_call(
        _make_kernel(H, Kd, cache_k),
        out_shape=out_shape,
        grid_spec=pltpu.PrefetchScalarGridSpec(
            num_scalar_prefetch=0,
            grid=grid,
            in_specs=[
                # q: new block per (batch, q-tile); batch dim squeezed.
                pl.BlockSpec((None, tq, D), lambda b, g, qt: (b, qt, 0)),
                # h: same block across q-tiles -> DMA'd once per (batch, g-tile).
                pl.BlockSpec((None, tg, D), lambda b, g, qt: (b, g, 0)),
                # Weights: constant block index -> resident for the whole grid.
                pl.BlockSpec((D, HKd), lambda b, g, qt: (0, 0)),
                pl.BlockSpec((D, HKd), lambda b, g, qt: (0, 0)),
            ],
            # Each grid step writes a distinct (H, tq, tg) output block.
            out_specs=pl.BlockSpec((H, None, tq, tg),
                                   lambda b, g, qt: (0, b, qt, g)),
            scratch_shapes=[
                pltpu.VMEM((HKd, tg), in_dtype),  # transposed per-(b,g) K cache
                pltpu.VMEM((tq, HKd), in_dtype),  # staged Q projection
            ],
        ),
        compiler_params=pltpu.CompilerParams(
            dimension_semantics=("parallel", "parallel", q_axis_sem),
            vmem_limit_bytes=vmem_limit,
        ),
        cost_estimate=pl.CostEstimate(
            flops=flops, transcendentals=0, bytes_accessed=bytes_accessed),
    )(q_in, h_in, wq_all, wk_all)


def reference_compat(q, h, w_query, w_key):
    """Plain-JAX reference mirroring the PyTorch forward."""
    Kd = w_query.shape[-1]
    norm_factor = 1.0 / math.sqrt(Kd)
    Q = jnp.einsum("bnd,hdk->hbnk", q, w_query)
    K = jnp.einsum("bgd,hdk->hbgk", h, w_key)
    return norm_factor * jnp.einsum("hbnk,hbgk->hbng", Q, K)


# ---------------------------------------------------------------------------
# Demo / self-check
# ---------------------------------------------------------------------------
if __name__ == "__main__":
    n_heads = 4
    input_dim = 16
    embed_dim = 32
    key_dim = embed_dim // n_heads  # val_dim = key_dim = 8
    batch = 2
    graph_size = 8
    n_query = 8

    key = jax.random.PRNGKey(0)
    k_q, k_h, k_wq, k_wk, k_q2, k_h2 = jax.random.split(key, 6)

    # Deterministic init matching init_parameters(): uniform(-stdv, stdv),
    # stdv = 1/sqrt(key_dim) (last dim of each parameter).
    stdv = 1.0 / math.sqrt(key_dim)
    w_query = jax.random.uniform(
        k_wq, (n_heads, input_dim, key_dim), minval=-stdv, maxval=stdv,
        dtype=jnp.float32)
    w_key = jax.random.uniform(
        k_wk, (n_heads, input_dim, key_dim), minval=-stdv, maxval=stdv,
        dtype=jnp.float32)

    # 1) Module-sized shapes, f32 path, single q-tile (all axes "parallel").
    q = jax.random.normal(k_q, (batch, n_query, input_dim), dtype=jnp.float32)
    h = jax.random.normal(k_h, (batch, graph_size, input_dim), dtype=jnp.float32)
    out = jax.block_until_ready(multi_head_compat(q, h, w_query, w_key))
    ref = reference_compat(q, h, w_query, w_key)
    assert out.shape == (n_heads, batch, n_query, graph_size), out.shape
    assert jnp.allclose(out, ref, atol=1e-4, rtol=1e-4), "f32 mismatch (small)"

    # 2) Multi-q-tile path exercising the cached transposed K projection
    #    ("arbitrary" innermost axis).
    nq2, ng2 = 64, 16
    q2 = jax.random.normal(k_q2, (batch, nq2, input_dim), dtype=jnp.float32)
    h2 = jax.random.normal(k_h2, (batch, ng2, input_dim), dtype=jnp.float32)
    out2 = jax.block_until_ready(
        multi_head_compat(q2, h2, w_query, w_key, q_tile=32))
    ref2 = reference_compat(q2, h2, w_query, w_key)
    assert out2.shape == (n_heads, batch, nq2, ng2), out2.shape
    assert jnp.allclose(out2, ref2, atol=1e-4, rtol=1e-4), "f32 mismatch (tiled)"

    # 3) bf16-input path (f32 accumulation / f32 output), loose tolerance.
    out3 = jax.block_until_ready(
        multi_head_compat(q2, h2, w_query, w_key, use_bf16_inputs=True, q_tile=32))
    assert jnp.allclose(out3, ref2, atol=5e-2, rtol=5e-2), "bf16 mismatch"

    print("KERNEL_OK")
</pallas_src>

<mosaic_0001>
module attributes {stable_mosaic.version = 11 : i64} {
  func.func @kernel(%arg0: i32, %arg1: i32, %arg2: i32, %arg3: memref<1x8x16xf32, #tpu.memory_space<vmem>>, %arg4: memref<1x8x16xf32, #tpu.memory_space<vmem>>, %arg5: memref<16x32xf32, #tpu.memory_space<vmem>>, %arg6: memref<16x32xf32, #tpu.memory_space<vmem>>, %arg7: memref<4x1x8x8xf32, #tpu.memory_space<vmem>>, %arg8: memref<32x8xf32, #tpu.memory_space<vmem>>, %arg9: memref<8x32xf32, #tpu.memory_space<vmem>>) attributes {dimension_semantics = [#tpu.dimension_semantics<parallel>, #tpu.dimension_semantics<parallel>, #tpu.dimension_semantics<parallel>], iteration_bounds = array<i64: 2, 1, 1>, scalar_prefetch = 0 : i64, scratch_operands = 2 : i64, tpu.core_type = #tpu.core_type<tc>, window_params = [{transform_indices = @transform_0, window_bounds = array<i64: 1, 8, 16>}, {transform_indices = @transform_1, window_bounds = array<i64: 1, 8, 16>}, {pipeline_mode = #tpu.pipeline_mode<synchronous>, transform_indices = @transform_2, window_bounds = array<i64: 16, 32>}, {pipeline_mode = #tpu.pipeline_mode<synchronous>, transform_indices = @transform_3, window_bounds = array<i64: 16, 32>}, {transform_indices = @transform_4, window_bounds = array<i64: 4, 1, 8, 8>}]} {
    %c0 = arith.constant 0 : index
    %c0_0 = arith.constant 0 : index
    %0 = vector.load %arg6[%c0, %c0_0] : memref<16x32xf32, #tpu.memory_space<vmem>>, vector<16x32xf32>
    %c0_1 = arith.constant 0 : index
    %c0_2 = arith.constant 0 : index
    %c0_3 = arith.constant 0 : index
    %1 = vector.load %arg4[%c0_1, %c0_2, %c0_3] : memref<1x8x16xf32, #tpu.memory_space<vmem>>, vector<1x8x16xf32>
    %2 = vector.shape_cast %1 : vector<1x8x16xf32> to vector<8x16xf32>
    %cst = arith.constant dense<0.000000e+00> : vector<32x8xf32>
    %3 = tpu.matmul %0, %2, %cst {dimension_numbers = #tpu.dot_dimension_numbers<[0], [1], [1], [0], [0, 1, 1, 0], [], []>} : vector<16x32xf32>, vector<8x16xf32>, vector<32x8xf32> -> vector<32x8xf32>
    %c0_4 = arith.constant 0 : index
    %c0_5 = arith.constant 0 : index
    %4 = vector.load %arg8[%c0_4, %c0_5] : memref<32x8xf32, #tpu.memory_space<vmem>>, vector<32x8xf32>
    tpu.vector_store %arg8[%c0_4, %c0_5], %3 {strides = array<i32>} : memref<32x8xf32, #tpu.memory_space<vmem>>, vector<32x8xf32>,
    %c0_6 = arith.constant 0 : index
    %c0_7 = arith.constant 0 : index
    %c0_8 = arith.constant 0 : index
    %5 = vector.load %arg3[%c0_6, %c0_7, %c0_8] : memref<1x8x16xf32, #tpu.memory_space<vmem>>, vector<1x8x16xf32>
    %6 = vector.shape_cast %5 : vector<1x8x16xf32> to vector<8x16xf32>
    %c0_9 = arith.constant 0 : index
    %c0_10 = arith.constant 0 : index
    %7 = vector.load %arg5[%c0_9, %c0_10] : memref<16x32xf32, #tpu.memory_space<vmem>>, vector<16x32xf32>
    %cst_11 = arith.constant dense<0.000000e+00> : vector<8x32xf32>
    %8 = tpu.matmul %6, %7, %cst_11 {dimension_numbers = #tpu.dot_dimension_numbers<[1], [0], [0], [1], [0, 0, 1, 1], [], []>} : vector<8x16xf32>, vector<16x32xf32>, vector<8x32xf32> -> vector<8x32xf32>
    %c0_12 = arith.constant 0 : index
    %c0_13 = arith.constant 0 : index
    %9 = vector.load %arg9[%c0_12, %c0_13] : memref<8x32xf32, #tpu.memory_space<vmem>>, vector<8x32xf32>
    tpu.vector_store %arg9[%c0_12, %c0_13], %8 {strides = array<i32>} : memref<8x32xf32, #tpu.memory_space<vmem>>, vector<8x32xf32>,
    %c0_14 = arith.constant 0 : index
    %c0_15 = arith.constant 0 : index
    %10 = vector.load %arg9[%c0_14, %c0_15] : memref<8x32xf32, #tpu.memory_space<vmem>>, vector<8x8xf32>
    %c0_16 = arith.constant 0 : index
    %c0_17 = arith.constant 0 : index
    %11 = vector.load %arg8[%c0_16, %c0_17] : memref<32x8xf32, #tpu.memory_space<vmem>>, vector<8x8xf32>
    %cst_18 = arith.constant dense<0.000000e+00> : vector<8x8xf32>
    %12 = tpu.matmul %10, %11, %cst_18 {dimension_numbers = #tpu.dot_dimension_numbers<[1], [0], [0], [1], [0, 0, 1, 1], [], []>} : vector<8x8xf32>, vector<8x8xf32>, vector<8x8xf32> -> vector<8x8xf32>
    %c0_19 = arith.constant 0 : index
    %c0_20 = arith.constant 0 : index
    %c0_21 = arith.constant 0 : index
    %c0_22 = arith.constant 0 : index
    %13 = vector.load %arg7[%c0_19, %c0_20, %c0_21, %c0_22] : memref<4x1x8x8xf32, #tpu.memory_space<vmem>>, vector<1x1x8x8xf32>
    %14 = vector.shape_cast %13 : vector<1x1x8x8xf32> to vector<8x8xf32>
    %15 = vector.shape_cast %12 : vector<8x8xf32> to vector<1x1x8x8xf32>
    tpu.vector_store %arg7[%c0_19, %c0_20, %c0_21, %c0_22], %15 {strides = array<i32>} : memref<4x1x8x8xf32, #tpu.memory_space<vmem>>, vector<1x1x8x8xf32>,
    %c0_23 = arith.constant 0 : index
    %c8 = arith.constant 8 : index
    %16 = vector.load %arg9[%c0_23, %c8] : memref<8x32xf32, #tpu.memory_space<vmem>>, vector<8x8xf32>
    %c8_24 = arith.constant 8 : index
    %c0_25 = arith.constant 0 : index
    %17 = vector.load %arg8[%c8_24, %c0_25] : memref<32x8xf32, #tpu.memory_space<vmem>>, vector<8x8xf32>
    %cst_26 = arith.constant dense<0.000000e+00> : vector<8x8xf32>
    %18 = tpu.matmul %16, %17, %cst_26 {dimension_numbers = #tpu.dot_dimension_numbers<[1], [0], [0], [1], [0, 0, 1, 1], [], []>} : vector<8x8xf32>, vector<8x8xf32>, vector<8x8xf32> -> vector<8x8xf32>
    %c1 = arith.constant 1 : index
    %c0_27 = arith.constant 0 : index
    %c0_28 = arith.constant 0 : index
    %c0_29 = arith.constant 0 : index
    %19 = vector.load %arg7[%c1, %c0_27, %c0_28, %c0_29] : memref<4x1x8x8xf32, #tpu.memory_space<vmem>>, vector<1x1x8x8xf32>
    %20 = vector.shape_cast %19 : vector<1x1x8x8xf32> to vector<8x8xf32>
    %21 = vector.shape_cast %18 : vector<8x8xf32> to vector<1x1x8x8xf32>
    tpu.vector_store %arg7[%c1, %c0_27, %c0_28, %c0_29], %21 {strides = array<i32>} : memref<4x1x8x8xf32, #tpu.memory_space<vmem>>, vector<1x1x8x8xf32>,
    %c0_30 = arith.constant 0 : index
    %c16 = arith.constant 16 : index
    %22 = vector.load %arg9[%c0_30, %c16] : memref<8x32xf32, #tpu.memory_space<vmem>>, vector<8x8xf32>
    %c16_31 = arith.constant 16 : index
    %c0_32 = arith.constant 0 : index
    %23 = vector.load %arg8[%c16_31, %c0_32] : memref<32x8xf32, #tpu.memory_space<vmem>>, vector<8x8xf32>
    %cst_33 = arith.constant dense<0.000000e+00> : vector<8x8xf32>
    %24 = tpu.matmul %22, %23, %cst_33 {dimension_numbers = #tpu.dot_dimension_numbers<[1], [0], [0], [1], [0, 0, 1, 1], [], []>} : vector<8x8xf32>, vector<8x8xf32>, vector<8x8xf32> -> vector<8x8xf32>
    %c2 = arith.constant 2 : index
    %c0_34 = arith.constant 0 : index
    %c0_35 = arith.constant 0 : index
    %c0_36 = arith.constant 0 : index
    %25 = vector.load %arg7[%c2, %c0_34, %c0_35, %c0_36] : memref<4x1x8x8xf32, #tpu.memory_space<vmem>>, vector<1x1x8x8xf32>
    %26 = vector.shape_cast %25 : vector<1x1x8x8xf32> to vector<8x8xf32>
    %27 = vector.shape_cast %24 : vector<8x8xf32> to vector<1x1x8x8xf32>
    tpu.vector_store %arg7[%c2, %c0_34, %c0_35, %c0_36], %27 {strides = array<i32>} : memref<4x1x8x8xf32, #tpu.memory_space<vmem>>, vector<1x1x8x8xf32>,
    %c0_37 = arith.constant 0 : index
    %c24 = arith.constant 24 : index
    %28 = vector.load %arg9[%c0_37, %c24] : memref<8x32xf32, #tpu.memory_space<vmem>>, vector<8x8xf32>
    %c24_38 = arith.constant 24 : index
    %c0_39 = arith.constant 0 : index
    %29 = vector.load %arg8[%c24_38, %c0_39] : memref<32x8xf32, #tpu.memory_space<vmem>>, vector<8x8xf32>
    %cst_40 = arith.constant dense<0.000000e+00> : vector<8x8xf32>
    %30 = tpu.matmul %28, %29, %cst_40 {dimension_numbers = #tpu.dot_dimension_numbers<[1], [0], [0], [1], [0, 0, 1, 1], [], []>} : vector<8x8xf32>, vector<8x8xf32>, vector<8x8xf32> -> vector<8x8xf32>
    %c3 = arith.constant 3 : index
    %c0_41 = arith.constant 0 : index
    %c0_42 = arith.constant 0 : index
    %c0_43 = arith.constant 0 : index
    %31 = vector.load %arg7[%c3, %c0_41, %c0_42, %c0_43] : memref<4x1x8x8xf32, #tpu.memory_space<vmem>>, vector<1x1x8x8xf32>
    %32 = vector.shape_cast %31 : vector<1x1x8x8xf32> to vector<8x8xf32>
    %33 = vector.shape_cast %30 : vector<8x8xf32> to vector<1x1x8x8xf32>
    tpu.vector_store %arg7[%c3, %c0_41, %c0_42, %c0_43], %33 {strides = array<i32>} : memref<4x1x8x8xf32, #tpu.memory_space<vmem>>, vector<1x1x8x8xf32>,
    return
  }
  func.func @transform_0(%arg0: i32, %arg1: i32, %arg2: i32) -> (i32, i32, i32) {
    %c0_i32 = arith.constant 0 : i32
    %c0_i32_0 = arith.constant 0 : i32
    return %arg0, %arg2, %c0_i32 : i32, i32, i32
  }
  func.func @transform_1(%arg0: i32, %arg1: i32, %arg2: i32) -> (i32, i32, i32) {
    %c0_i32 = arith.constant 0 : i32
    %c0_i32_0 = arith.constant 0 : i32
    return %arg0, %arg1, %c0_i32 : i32, i32, i32
  }
  func.func @transform_2(%arg0: i32, %arg1: i32, %arg2: i32) -> (i32, i32) {
    %c0_i32 = arith.constant 0 : i32
    %c0_i32_0 = arith.constant 0 : i32
    %c0_i32_1 = arith.constant 0 : i32
    return %c0_i32, %c0_i32_0 : i32, i32
  }
  func.func @transform_3(%arg0: i32, %arg1: i32, %arg2: i32) -> (i32, i32) {
    %c0_i32 = arith.constant 0 : i32
    %c0_i32_0 = arith.constant 0 : i32
    %c0_i32_1 = arith.constant 0 : i32
    return %c0_i32, %c0_i32_0 : i32, i32
  }
  func.func @transform_4(%arg0: i32, %arg1: i32, %arg2: i32) -> (i32, i32, i32, i32) {
    %c0_i32 = arith.constant 0 : i32
    %c0_i32_0 = arith.constant 0 : i32
    return %c0_i32, %arg0, %arg2, %arg1 : i32, i32, i32, i32
  }
}

</mosaic_0001>

<llo_original>
// kernel: tpu_custom_call.1
$region0: #{tpu_custom_call.1}
  #allocation0 [shape = 'u32[]', space=smem, size = 0x4, offset = 0x4, fixed_abs, tag = 'smem constant byte address 0x4 - core index']
  #allocation1 [shape = 'u32[144,128]{1,0:T(1,128)}', space=vmem, size = 0x12000, scoped, tag = 'internal scratch']
  #allocation2 [shape = 'f32[32,8]{1,0:T(8,128)}', space=vmem, size = 0x4000, scoped, tag = 'scratch operand']
  #allocation3 [shape = 'f32[8,32]{1,0:T(8,128)}', space=vmem, size = 0x1000, scoped, tag = 'scratch operand']
  %s0 = inlined_call_operand.hbm [shape: f32[2,8,16], index: 0, kind: input, shape index: {}]
  %s1 = inlined_call_operand.hbm [shape: f32[2,8,16], index: 1, kind: input, shape index: {}]
  %s2 = inlined_call_operand.hbm [shape: f32[16,32], index: 2, kind: input, shape index: {}]
  %s3 = inlined_call_operand.hbm [shape: f32[16,32], index: 3, kind: input, shape index: {}]
  %s4 = inlined_call_operand.hbm [shape: f32[4,2,8,8], index: 4, kind: output, shape index: {}]
  %s5 = sld [smem:[#allocation0]]
  $region65: #{tpu_custom_call.1} parent=0
    _
  %s7 = ssub.s32 1, %s5
  %s8 = scalar_select 0, %s7, %s5
  $region1: #{tpu_custom_call.1} parent=0
    #allocation4 [shape = 'u8[8192]{0}', space=vmem, size = 0x2000, scoped, tag = 'input window, operand 0']
    #allocation5 [shape = 's32[2]{0}', space=sflag, size = 0x8, scoped, tag = 'scoped memory for tpu_custom_call.1']
    #allocation6 [shape = 's32[2]{0}', space=sflag, size = 0x8, scoped, tag = 'scoped memory for tpu_custom_call.1']
    #allocation7 [shape = 'u8[8192]{0}', space=vmem, size = 0x2000, scoped, tag = 'input window, operand 1']
    #allocation8 [shape = 's32[2]{0}', space=sflag, size = 0x8, scoped, tag = 'scoped memory for tpu_custom_call.1']
    #allocation9 [shape = 'u8[8192]{0}', space=vmem, size = 0x2000, scoped, tag = 'input window, operand 2, single buffered']
    #allocation10 [shape = 'u8[8192]{0}', space=vmem, size = 0x2000, scoped, tag = 'input window, operand 3, single buffered']
    #allocation11 [shape = 's32[1]{0}', space=sflag, size = 0x4, scoped, tag = 'scoped memory for tpu_custom_call.1']
    #allocation12 [shape = 'u8[32768]{0}', space=vmem, size = 0x8000, scoped, tag = 'output window, operand 0']
    %9 = vsyncpa [#allocation5], 0
    %s10 = scalar_lea.sflag [#allocation5], 1
    %11 = vsyncpa %s10, 0
    %12 = vsyncpa [#allocation8], 0
    %s13 = scalar_lea.sflag [#allocation8], 1
    %14 = vsyncpa %s13, 0
    %15 = vsyncpa [#allocation11], 0
    %16 = vsyncpa [#allocation6], 0
    %s17 = scalar_lea.sflag [#allocation6], 1
    %18 = vsyncpa %s17, 0
    loop: start=0, step=1, limit=4
    $region2: #{tpu_custom_call.1} parent=1 // loop_pre_header
      _
    $region3: #{tpu_custom_call.1} parent=1 // loop_header
      %s20 = sphi 0, %s24
      %p21 = scmp.ge.s32.totalorder %s20, 4
      %s27 = sphi 0, %s46
      %s28 = sphi 0, %s42
      %s29 = sphi 0, %s38
      %s30 = sphi 0, %s27
      %s31 = sphi 0, %s28
      %s32 = sphi 0, %s29
      %s33 = sphi 0, %s30
      %s34 = sphi 0, %s31
      %s35 = sphi 0, %s32
      %s51 = sphi 0, %s53
      %s54 = sphi 0, %s51
      %s55 = sphi 0, %s54
      %s71 = sphi 0, %s55
      %s79 = sphi 0, %s81
      %s82 = sphi 0, %s79
      %s83 = sphi 0, %s82
      %s99 = sphi 0, %s83
      %s103 = sphi 0, %s103
      %s105 = sphi 0, %s103
      %s106 = sphi 0, %s105
      %s120 = sphi 0, %s106
      %s124 = sphi 0, %s124
      %s126 = sphi 0, %s124
      %s127 = sphi 0, %s126
      %s141 = sphi 0, %s127
      %s151 = sphi 0, %s153
      %s154 = sphi 0, %s151
      %s155 = sphi 0, %s154
      %s171 = sphi 0, %s155
    $region4: #{tpu_custom_call.1} parent=1 // loop_header_branch
      %23 = sbr.rel (%p21) target = $region8
    $region5: #{tpu_custom_call.1} parent=1 // loop_body
      %s25 = ssub.s32 %s20, 1
      %s26 = ssub.s32 %s20, 2
      %s36 = sadd.s32 1, %s29
      %p37 = scmp.ge.s32.totalorder %s36, 1
      %s38 = scalar_select %p37, 0, %s36
      %s39 = sadd.s32 1, %s28
      %s40 = scalar_select %p37, %s39, %s28
      %p41 = scmp.ge.s32.totalorder %s40, 1
      %s42 = scalar_select %p41, 0, %s40
      %s43 = sadd.s32 1, %s27
      %s44 = scalar_select %p41, %s43, %s27
      %p45 = scmp.ge.s32.totalorder %s44, 2
      %s46 = scalar_select %p45, 0, %s44
      %s47 = ssub.s32 %s27, %s46
      %s48 = ssub.s32 %s29, %s38
      %s49 = sor.u32 %s47, %s48
      %p50 = scmp.eq.s32.totalorder %s49, 0
      %s52 = sadd.s32 %s51, 1
      %s53 = scalar_select %p50, %s51, %s52
      %p56 = pneg %p50
      %p57 = scmp.eq.s32.totalorder %s20, 1
      %p58 = por %p56, %p57
      %p59 = scmp.ne.s32.totalorder %s51, %s54
      %p60 = scmp.eq.s32.totalorder %s20, 0
      %p61 = por %p59, %p60
      %p62 = scmp.ne.s32.totalorder %s51, %s54
      %p63 = scmp.eq.s32.totalorder %s25, 1
      %p64 = por %p62, %p63
      %p65 = scmp.ne.s32.totalorder %s54, %s55
      %p66 = scmp.eq.s32.totalorder %s25, 0
      %p67 = por %p65, %p66
      %p68 = scmp.ne.s32.totalorder %s54, %s55
      %p69 = scmp.eq.s32.totalorder %s26, 1
      %p70 = por %p68, %p69
      %p72 = scmp.ne.s32.totalorder %s55, %s71
      %p73 = scmp.eq.s32.totalorder %s26, 0
      %p74 = por %p72, %p73
      %s75 = ssub.s32 %s27, %s46
      %s76 = ssub.s32 %s28, %s42
      %s77 = sor.u32 %s75, %s76
      %p78 = scmp.eq.s32.totalorder %s77, 0
      %s80 = sadd.s32 %s79, 1
      %s81 = scalar_select %p78, %s79, %s80
      %p84 = pneg %p78
      %p85 = scmp.eq.s32.totalorder %s20, 1
      %p86 = por %p84, %p85
      %p87 = scmp.ne.s32.totalorder %s79, %s82
      %p88 = scmp.eq.s32.totalorder %s20, 0
      %p89 = por %p87, %p88
      %p90 = scmp.ne.s32.totalorder %s79, %s82
      %p91 = scmp.eq.s32.totalorder %s25, 1
      %p92 = por %p90, %p91
      %p93 = scmp.ne.s32.totalorder %s82, %s83
      %p94 = scmp.eq.s32.totalorder %s25, 0
      %p95 = por %p93, %p94
      %p96 = scmp.ne.s32.totalorder %s82, %s83
      %p97 = scmp.eq.s32.totalorder %s26, 1
      %p98 = por %p96, %p97
      %p100 = scmp.ne.s32.totalorder %s83, %s99
      %p101 = scmp.eq.s32.totalorder %s26, 0
      %p102 = por %p100, %p101
      %s104 = sadd.s32 %s103, 1
      %p107 = scmp.eq.s32.totalorder %s20, 1
      %p108 = scmp.ne.s32.totalorder %s103, %s105
      %p109 = scmp.eq.s32.totalorder %s20, 0
      %p110 = por %p108, %p109
      %p111 = scmp.ne.s32.totalorder %s103, %s105
      %p112 = scmp.eq.s32.totalorder %s25, 1
      %p113 = por %p111, %p112
      %p114 = scmp.ne.s32.totalorder %s105, %s106
      %p115 = scmp.eq.s32.totalorder %s25, 0
      %p116 = por %p114, %p115
      %p117 = scmp.ne.s32.totalorder %s105, %s106
      %p118 = scmp.eq.s32.totalorder %s26, 1
      %p119 = por %p117, %p118
      %p121 = scmp.ne.s32.totalorder %s106, %s120
      %p122 = scmp.eq.s32.totalorder %s26, 0
      %p123 = por %p121, %p122
      %s125 = sadd.s32 %s124, 1
      %p128 = scmp.eq.s32.totalorder %s20, 1
      %p129 = scmp.ne.s32.totalorder %s124, %s126
      %p130 = scmp.eq.s32.totalorder %s20, 0
      %p131 = por %p129, %p130
      %p132 = scmp.ne.s32.totalorder %s124, %s126
      %p133 = scmp.eq.s32.totalorder %s25, 1
      %p134 = por %p132, %p133
      %p135 = scmp.ne.s32.totalorder %s126, %s127
      %p136 = scmp.eq.s32.totalorder %s25, 0
      %p137 = por %p135, %p136
      %p138 = scmp.ne.s32.totalorder %s126, %s127
      %p139 = scmp.eq.s32.totalorder %s26, 1
      %p140 = por %p138, %p139
      %p142 = scmp.ne.s32.totalorder %s127, %s141
      %p143 = scmp.eq.s32.totalorder %s26, 0
      %p144 = por %p142, %p143
      %s145 = ssub.s32 %s27, %s46
      %s146 = ssub.s32 %s29, %s38
      %s147 = sor.u32 %s145, %s146
      %s148 = ssub.s32 %s28, %s42
      %s149 = sor.u32 %s147, %s148
      %p150 = scmp.eq.s32.totalorder %s149, 0
      %s152 = sadd.s32 %s151, 1
      %s153 = scalar_select %p150, %s151, %s152
      %p156 = pneg %p150
      %p157 = scmp.eq.s32.totalorder %s20, 1
      %p158 = por %p156, %p157
      %p159 = scmp.ne.s32.totalorder %s151, %s154
      %p160 = scmp.eq.s32.totalorder %s20, 0
      %p161 = por %p159, %p160
      %p162 = scmp.ne.s32.totalorder %s151, %s154
      %p163 = scmp.eq.s32.totalorder %s25, 1
      %p164 = por %p162, %p163
      %p165 = scmp.ne.s32.totalorder %s154, %s155
      %p166 = scmp.eq.s32.totalorder %s25, 0
      %p167 = por %p165, %p166
      %p168 = scmp.ne.s32.totalorder %s154, %s155
      %p169 = scmp.eq.s32.totalorder %s26, 1
      %p170 = por %p168, %p169
      %p172 = scmp.ne.s32.totalorder %s155, %s171
      %p173 = scmp.eq.s32.totalorder %s26, 0
      %p174 = por %p172, %p173
      %p175 = scmp.le.s32.totalorder 1, %s20
      %p176 = scmp.lt.s32.totalorder %s20, 3
      %p177 = pnand %p175, %p176
      %p178 = pneg %p177
      // Predicated region
      $region9: #{tpu_custom_call.1} parent=5 // pred_check
        _
      $region10: #{tpu_custom_call.1} parent=5 // pred_check_branch
        %180 = sbr.rel (%p177) target = $region12
      $region11: #{tpu_custom_call.1} parent=5 // pred_region
        %s181 = ssub.s32 %s20, 1
        // Predicated region
        $region13: #{tpu_custom_call.1} parent=11 // pred_check
          %p182 = pneg %p116
        $region14: #{tpu_custom_call.1} parent=11 // pred_check_branch
          %184 = sbr.rel (%p182) target = $region16
        $region15: #{tpu_custom_call.1} parent=11 // pred_region
          %s186 = ssub.s32 256, 256
          %187 = vsyncadd [#allocation8], %s186
          %s188 = sshll.u32 [#allocation9], 4
          %s189 = int_to_ptr.vmem [resolvable:$true] %s188
          %194 = dma.hbm_to_vmem [thread:$0]  %s2, 256, %s189, [#allocation8], 128, 128, 8
        $region16: #{tpu_custom_call.1} parent=11 // pred_fallthru
          _
        // Predicated region
        $region17: #{tpu_custom_call.1} parent=11 // pred_check
          %p195 = pneg %p137
        $region18: #{tpu_custom_call.1} parent=11 // pred_check_branch
          %197 = sbr.rel (%p195) target = $region20
        $region19: #{tpu_custom_call.1} parent=11 // pred_region
          %s199 = ssub.s32 256, 256
          %200 = vsyncadd [#allocation11], %s199
          %s201 = sshll.u32 [#allocation10], 4
          %s202 = int_to_ptr.vmem [resolvable:$true] %s201
          %207 = dma.hbm_to_vmem [thread:$0]  %s3, 256, %s202, [#allocation11], 128, 128, 8
        $region20: #{tpu_custom_call.1} parent=11 // pred_fallthru
          _
      $region12: #{tpu_custom_call.1} parent=5 // pred_fallthru
        _
      %p208 = scmp.lt.s32.totalorder %s20, 2
      // Predicated region
      $region21: #{tpu_custom_call.1} parent=5 // pred_check
        %p209 = pneg %p208
      $region22: #{tpu_custom_call.1} parent=5 // pred_check_branch
        %211 = sbr.rel (%p209) target = $region24
      $region23: #{tpu_custom_call.1} parent=5 // pred_region
        // Predicated region
        $region25: #{tpu_custom_call.1} parent=23 // pred_check
          %p212 = pneg %p61
        $region26: #{tpu_custom_call.1} parent=23 // pred_check_branch
          %214 = sbr.rel (%p212) target = $region28
        $region27: #{tpu_custom_call.1} parent=23 // pred_region
          %s215 = sand.u32 %s51, 1
          %s216 = scalar_lea.sflag [#allocation5], %s215
          %s217 = sand.u32 %s51, 1
          %s218 = smul.addr %s217, 8
          %s219 = scalar_lea.vmem [#allocation4], %s218
          %s221 = ssub.s32 128, 128
          %222 = vsyncadd %s216, %s221
          %s223 = sadd.s32 %s29, %s27
          %s224 = smul.addr %s223, 128
          %s225 = scalar_lea.hbm %s0, %s224
          %s227 = sshll.u32 %s219, 4
          %s228 = int_to_ptr.vmem [resolvable:$true] %s227
          %230 = dma.hbm_to_vmem [thread:$0]  %s225, 128, %s228, %s216
        $region28: #{tpu_custom_call.1} parent=23 // pred_fallthru
          _
        // Predicated region
        $region29: #{tpu_custom_call.1} parent=23 // pred_check
          %p231 = pneg %p89
        $region30: #{tpu_custom_call.1} parent=23 // pred_check_branch
          %233 = sbr.rel (%p231) target = $region32
        $region31: #{tpu_custom_call.1} parent=23 // pred_region
          %s234 = sand.u32 %s20, 1
          %s235 = scalar_lea.sflag [#allocation8], %s234
          %s236 = sand.u32 %s79, 1
          %s237 = smul.addr %s236, 8
          %s238 = scalar_lea.vmem [#allocation7], %s237
          %s240 = ssub.s32 128, 128
          %241 = vsyncadd %s235, %s240
          %s242 = sadd.s32 %s28, %s27
          %s243 = smul.addr %s242, 128
          %s244 = scalar_lea.hbm %s1, %s243
          %s246 = sshll.u32 %s238, 4
          %s247 = int_to_ptr.vmem [resolvable:$true] %s246
          %249 = dma.hbm_to_vmem [thread:$0]  %s244, 128, %s247, %s235
        $region32: #{tpu_custom_call.1} parent=23 // pred_fallthru
          _
      $region24: #{tpu_custom_call.1} parent=5 // pred_fallthru
        _
      %p250 = scmp.le.s32.totalorder 1, %s20
      %p251 = scmp.lt.s32.totalorder %s20, 3
      %p252 = pnand %p250, %p251
      %p253 = pneg %p252
      // Predicated region
      $region33: #{tpu_custom_call.1} parent=5 // pred_check
        _
      $region34: #{tpu_custom_call.1} parent=5 // pred_check_branch
        %255 = sbr.rel (%p252) target = $region36
      $region35: #{tpu_custom_call.1} parent=5 // pred_region
        %s256 = ssub.s32 %s20, 1
        %s257 = sand.u32 %s54, 1
        %s258 = scalar_lea.sflag [#allocation5], %s257
        %s259 = sand.u32 %s54, 1
        %s260 = smul.addr %s259, 8
        %s261 = scalar_lea.vmem [#allocation4], %s260
        // Predicated region
        $region37: #{tpu_custom_call.1} parent=35 // pred_check
          %p262 = pneg %p67
        $region38: #{tpu_custom_call.1} parent=35 // pred_check_branch
          %264 = sbr.rel (%p262) target = $region40
        $region39: #{tpu_custom_call.1} parent=35 // pred_region
          %265 = dma.done %s258, 128
        $region40: #{tpu_custom_call.1} parent=35 // pred_fallthru
          _
        %s266 = sand.u32 %s25, 1
        %s267 = scalar_lea.sflag [#allocation8], %s266
        %s268 = sand.u32 %s82, 1
        %s269 = smul.addr %s268, 8
        %s270 = scalar_lea.vmem [#allocation7], %s269
        // Predicated region
        $region41: #{tpu_custom_call.1} parent=35 // pred_check
          %p271 = pneg %p95
        $region42: #{tpu_custom_call.1} parent=35 // pred_check_branch
          %273 = sbr.rel (%p271) target = $region44
        $region43: #{tpu_custom_call.1} parent=35 // pred_region
          %274 = dma.done %s267, 128
        $region44: #{tpu_custom_call.1} parent=35 // pred_fallthru
          _
        // Predicated region
        $region45: #{tpu_custom_call.1} parent=35 // pred_check
          %p275 = pneg %p116
        $region46: #{tpu_custom_call.1} parent=35 // pred_check_branch
          %277 = sbr.rel (%p275) target = $region48
        $region47: #{tpu_custom_call.1} parent=35 // pred_region
          %278 = dma.done [#allocation8], 256
        $region48: #{tpu_custom_call.1} parent=35 // pred_fallthru
          _
        // Predicated region
        $region49: #{tpu_custom_call.1} parent=35 // pred_check
          %p279 = pneg %p137
        $region50: #{tpu_custom_call.1} parent=35 // pred_check_branch
          %281 = sbr.rel (%p279) target = $region52
        $region51: #{tpu_custom_call.1} parent=35 // pred_region
          %282 = dma.done [#allocation11], 256
        $region52: #{tpu_custom_call.1} parent=35 // pred_fallthru
          _
        %s283 = sand.u32 %s54, 1
        %s284 = scalar_lea.sflag [#allocation5], %s283
        %s285 = sand.u32 %s54, 1
        %s286 = smul.addr %s285, 8
        %s287 = scalar_lea.vmem [#allocation4], %s286
        %p288 = pneg %p67
        %p289 = pneg %p64
        %s290 = sand.u32 %s25, 1
        %s291 = scalar_lea.sflag [#allocation8], %s290
        %s292 = sand.u32 %s82, 1
        %s293 = smul.addr %s292, 8
        %s294 = scalar_lea.vmem [#allocation7], %s293
        %p295 = pneg %p95
        %p296 = pneg %p92
        %p297 = pneg %p116
        %p298 = pneg %p113
        %p299 = pneg %p137
        %p300 = pneg %p134
        %p301 = pneg %p167
        %p302 = pneg %p164
        %s303 = sand.u32 %s154, 1
        %s304 = scalar_lea.sflag [#allocation6], %s303
        %s305 = sand.u32 %s154, 1
        %s306 = smul.addr %s305, 32
        %s307 = scalar_lea.vmem [#allocation12], %s306
        %v308 = vld [vmem:[#allocation10] sm:$0xff]
        %v309 = vld [vmem:[#allocation10 + $0x8] sm:$0xff]
        %v310 = vld [vmem:[%s270] sm:$0xff]
        %311 = vxpose.xlu0.b32.start [1/16] %v308, 128
        %312 = vxpose.xlu0.b32.cont [2/16] %v309, 128
        %313 = vxpose.xlu0.b32.cont [3/16] 0.0, 128
        %314 = vxpose.xlu0.b32.cont [4/16] 0.0, 128
        %315 = vxpose.xlu0.b32.cont [5/16] 0.0, 128
        %316 = vxpose.xlu0.b32.cont [6/16] 0.0, 128
        %317 = vxpose.xlu0.b32.cont [7/16] 0.0, 128
        %318 = vxpose.xlu0.b32.cont [8/16] 0.0, 128
        %319 = vxpose.xlu0.b32.cont [9/16] 0.0, 128
        %320 = vxpose.xlu0.b32.cont [10/16] 0.0, 128
        %321 = vxpose.xlu0.b32.cont [11/16] 0.0, 128
        %322 = vxpose.xlu0.b32.cont [12/16] 0.0, 128
        %323 = vxpose.xlu0.b32.cont [13/16] 0.0, 128
        %324 = vxpose.xlu0.b32.cont [14/16] 0.0, 128
        %325 = vxpose.xlu0.b32.cont [15/16] 0.0, 128
        %326 = vxpose.xlu0.b32.end [16/16] 0.0, 128
        %v327 = vpop.trf.xlu0
        %v328 = vpop.trf.xlu0
        %v329 = vpop.trf.xlu0
        %v330 = vpop.trf.xlu0
        %v331 = vpop.trf.xlu0
        %v332 = vpop.trf.xlu0
        %v333 = vpop.trf.xlu0
        %v334 = vpop.trf.xlu0
        %v335 = vpop.trf.xlu0
        %v336 = vpop.trf.xlu0
        %v337 = vpop.trf.xlu0
        %v338 = vpop.trf.xlu0
        %v339 = vpop.trf.xlu0
        %v340 = vpop.trf.xlu0
        %v341 = vpop.trf.xlu0
        %v342 = vpop.trf.xlu0
        %vm343 = vcmask 130048
        %v345 = vsel %vm343, %v327, 0
        %v348 = vsel %vm343, %v328, 0
        %v351 = vsel %vm343, %v329, 0
        %v354 = vsel %vm343, %v330, 0
        %v357 = vsel %vm343, %v310, 0
        %359 = vmatprep.subr.mxu0 0.0
        %360 = vmatpush1.xpose.msra.mxu0 0.0
        %361 = vmatprep.subr.mxu0 0.0
        %362 = vmatpush1.xpose.msra.mxu0 0.0
        %363 = vmatprep.subr.mxu0 0.0
        %364 = vmatpush1.xpose.msra.mxu0 0.0
        %365 = vmatprep.subr.mxu0 0.0
        %366 = vmatpush1.xpose.msra.mxu0 0.0
        %367 = vmatprep.subr.mxu0 0.0
        %368 = vmatpush1.xpose.msra.mxu0 0.0
        %369 = vmatprep.subr.mxu0 0.0
        %370 = vmatpush1.xpose.msra.mxu0 0.0
        %371 = vmatprep.subr.mxu0 0.0
        %372 = vmatpush1.xpose.msra.mxu0 0.0
        %373 = vmatprep.subr.mxu0 0.0
        %374 = vmatpush1.xpose.msra.mxu0 0.0
        %375 = vmatprep.subr.mxu0 0.0
        %376 = vmatpush1.xpose.msra.mxu0 0.0
        %377 = vmatprep.subr.mxu0 0.0
        %378 = vmatpush1.xpose.msra.mxu0 0.0
        %379 = vmatprep.subr.mxu0 0.0
        %380 = vmatpush1.xpose.msra.mxu0 0.0
        %381 = vmatprep.subr.mxu0 0.0
        %382 = vmatpush1.xpose.msra.mxu0 0.0
        %383 = vmatprep.subr.mxu0 0.0
        %384 = vmatpush1.xpose.msra.mxu0 0.0
        %385 = vmatprep.subr.mxu0 0.0
        %386 = vmatpush1.xpose.msra.mxu0 0.0
        %387 = vmatprep.subr.mxu0 0.0
        %388 = vmatpush1.xpose.msra.mxu0 0.0
        %389 = vmatprep.subr.mxu0 0.0
        %390 = vmatpush1.xpose.msra.mxu0 %v357
        %391 = vmatprep.subr.mxu0 0.0
        %392 = vmatpush2.xpose.msra.mxu0 0.0
        %393 = vmatprep.subr.mxu0 0.0
        %394 = vmatpush2.xpose.msra.mxu0 0.0
        %395 = vmatprep.subr.mxu0 0.0
        %396 = vmatpush2.xpose.msra.mxu0 0.0
        %397 = vmatprep.subr.mxu0 0.0
        %398 = vmatpush2.xpose.msra.mxu0 0.0
        %399 = vmatprep.subr.mxu0 0.0
        %400 = vmatpush2.xpose.msra.mxu0 0.0
        %401 = vmatprep.subr.mxu0 0.0
        %402 = vmatpush2.xpose.msra.mxu0 0.0
        %403 = vmatprep.subr.mxu0 0.0
        %404 = vmatpush2.xpose.msra.mxu0 0.0
        %405 = vmatprep.subr.mxu0 0.0
        %406 = vmatpush2.xpose.msra.mxu0 0.0
        %407 = vmatprep.subr.mxu0 0.0
        %408 = vmatpush2.xpose.msra.mxu0 0.0
        %409 = vmatprep.subr.mxu0 0.0
        %410 = vmatpush2.xpose.msra.mxu0 0.0
        %411 = vmatprep.subr.mxu0 0.0
        %412 = vmatpush2.xpose.msra.mxu0 0.0
        %413 = vmatprep.subr.mxu0 0.0
        %414 = vmatpush2.xpose.msra.mxu0 0.0
        %415 = vmatprep.subr.mxu0 0.0
        %416 = vmatpush2.xpose.msra.mxu0 0.0
        %417 = vmatprep.subr.mxu0 0.0
        %418 = vmatpush2.xpose.msra.mxu0 0.0
        %419 = vmatprep.subr.mxu0 0.0
        %420 = vmatpush2.xpose.msra.mxu0 0.0
        %421 = vmatprep.subr.mxu0 0.0
        %422 = vmatpush2.xpose.msra.mxu0 0.0
        %423 = vmatprep.mubr.f32.mxu0 0.0
        %424 = vmatmul.mubr.f32.gmra.mxu0 %v345
        %v425 = vpop.f32.mrf.mxu0
        %v426 = vadd.f32 0.0, %v425
        %v427 = vpop.f32.mrf.mxu0
        %428 = vmatprep.mubr.f32.mxu0 0.0
        %429 = vmatmul.mubr.f32.gmra.mxu0 %v348
        %v430 = vpop.f32.mrf.mxu0
        %v431 = vadd.f32 0.0, %v430
        %v432 = vpop.f32.mrf.mxu0
        %433 = vmatprep.mubr.f32.mxu0 0.0
        %434 = vmatmul.mubr.f32.gmra.mxu0 %v351
        %v435 = vpop.f32.mrf.mxu0
        %v436 = vadd.f32 0.0, %v435
        %v437 = vpop.f32.mrf.mxu0
        %438 = vmatprep.mubr.f32.mxu0 0.0
        %439 = vmatmul.mubr.f32.gmra.mxu0 %v354
        %v440 = vpop.f32.mrf.mxu0
        %v441 = vadd.f32 0.0, %v440
        %v442 = vpop.f32.mrf.mxu0
        %443 = vdwg.mxu0
        %vm444 = vcmask 64512
        %445 = vst.msk [vmem:[#allocation2] sm:$0xff] %vm444, %v426
        %446 = vst.msk [vmem:[#allocation2 + $0x8] sm:$0xff] %vm444, %v431
        %447 = vst.msk [vmem:[#allocation2 + $0x10] sm:$0xff] %vm444, %v436
        %448 = vst.msk [vmem:[#allocation2 + $0x18] sm:$0xff] %vm444, %v441
        %v449 = vld [vmem:[%s261] sm:$0xff]
        %v450 = vld [vmem:[#allocation9] sm:$0xff]
        %v451 = vld [vmem:[#allocation9 + $0x8] sm:$0xff]
        %v453 = vsel %vm343, %v449, 0
        %455 = vmatprep.subr.mxu0 0.0
        %456 = vmatpush1.msra.mxu0 0.0
        %457 = vmatprep.subr.mxu0 0.0
        %458 = vmatpush1.msra.mxu0 0.0
        %459 = vmatprep.subr.mxu0 0.0
        %460 = vmatpush1.msra.mxu0 0.0
        %461 = vmatprep.subr.mxu0 0.0
        %462 = vmatpush1.msra.mxu0 0.0
        %463 = vmatprep.subr.mxu0 0.0
        %464 = vmatpush1.msra.mxu0 0.0
        %465 = vmatprep.subr.mxu0 0.0
        %466 = vmatpush1.msra.mxu0 0.0
        %467 = vmatprep.subr.mxu0 0.0
        %468 = vmatpush1.msra.mxu0 0.0
        %469 = vmatprep.subr.mxu0 0.0
        %470 = vmatpush1.msra.mxu0 0.0
        %471 = vmatprep.subr.mxu0 0.0
        %472 = vmatpush1.msra.mxu0 0.0
        %473 = vmatprep.subr.mxu0 0.0
        %474 = vmatpush1.msra.mxu0 0.0
        %475 = vmatprep.subr.mxu0 0.0
        %476 = vmatpush1.msra.mxu0 0.0
        %477 = vmatprep.subr.mxu0 0.0
        %478 = vmatpush1.msra.mxu0 0.0
        %479 = vmatprep.subr.mxu0 0.0
        %480 = vmatpush1.msra.mxu0 0.0
        %481 = vmatprep.subr.mxu0 0.0
        %482 = vmatpush1.msra.mxu0 0.0
        %483 = vmatprep.subr.mxu0 0.0
        %484 = vmatpush1.msra.mxu0 %v451
        %485 = vmatprep.subr.mxu0 0.0
        %486 = vmatpush1.msra.mxu0 %v450
        %487 = vmatprep.subr.mxu0 0.0
        %488 = vmatpush2.msra.mxu0 0.0
        %489 = vmatprep.subr.mxu0 0.0
        %490 = vmatpush2.msra.mxu0 0.0
        %491 = vmatprep.subr.mxu0 0.0
        %492 = vmatpush2.msra.mxu0 0.0
        %493 = vmatprep.subr.mxu0 0.0
        %494 = vmatpush2.msra.mxu0 0.0
        %495 = vmatprep.subr.mxu0 0.0
        %496 = vmatpush2.msra.mxu0 0.0
        %497 = vmatprep.subr.mxu0 0.0
        %498 = vmatpush2.msra.mxu0 0.0
        %499 = vmatprep.subr.mxu0 0.0
        %500 = vmatpush2.msra.mxu0 0.0
        %501 = vmatprep.subr.mxu0 0.0
        %502 = vmatpush2.msra.mxu0 0.0
        %503 = vmatprep.subr.mxu0 0.0
        %504 = vmatpush2.msra.mxu0 0.0
        %505 = vmatprep.subr.mxu0 0.0
        %506 = vmatpush2.msra.mxu0 0.0
        %507 = vmatprep.subr.mxu0 0.0
        %508 = vmatpush2.msra.mxu0 0.0
        %509 = vmatprep.subr.mxu0 0.0
        %510 = vmatpush2.msra.mxu0 0.0
        %511 = vmatprep.subr.mxu0 0.0
        %512 = vmatpush2.msra.mxu0 0.0
        %513 = vmatprep.subr.mxu0 0.0
        %514 = vmatpush2.msra.mxu0 0.0
        %515 = vmatprep.subr.mxu0 0.0
        %516 = vmatpush2.msra.mxu0 0.0
        %517 = vmatprep.subr.mxu0 0.0
        %518 = vmatpush2.msra.mxu0 0.0
        %519 = vmatprep.mubr.f32.mxu0 0.0
        %520 = vmatmul.mubr.f32.gmra.mxu0 %v453
        %v521 = vpop.f32.mrf.mxu0
        %v522 = vadd.f32 0.0, %v521
        %v523 = vpop.f32.mrf.mxu0
        %524 = vdwg.mxu0
        %vm525 = vcmask 261120
        %526 = vst.msk [vmem:[#allocation3] sm:$0xff] %vm525, %v522
        %v527 = vld [vmem:[#allocation3] sm:$0xff]
        %v528 = vld [vmem:[#allocation2] sm:$0xff]
        %v530 = vsel %vm444, %v527, 0
        %532 = vmatprep.subr.mxu0 0.0
        %533 = vmatpush1.msra.mxu0 0.0
        %534 = vmatprep.subr.mxu0 0.0
        %535 = vmatpush1.msra.mxu0 0.0
        %536 = vmatprep.subr.mxu0 0.0
        %537 = vmatpush1.msra.mxu0 0.0
        %538 = vmatprep.subr.mxu0 0.0
        %539 = vmatpush1.msra.mxu0 0.0
        %540 = vmatprep.subr.mxu0 0.0
        %541 = vmatpush1.msra.mxu0 0.0
        %542 = vmatprep.subr.mxu0 0.0
        %543 = vmatpush1.msra.mxu0 0.0
        %544 = vmatprep.subr.mxu0 0.0
        %545 = vmatpush1.msra.mxu0 0.0
        %546 = vmatprep.subr.mxu0 0.0
        %547 = vmatpush1.msra.mxu0 0.0
        %548 = vmatprep.subr.mxu0 0.0
        %549 = vmatpush1.msra.mxu0 0.0
        %550 = vmatprep.subr.mxu0 0.0
        %551 = vmatpush1.msra.mxu0 0.0
        %552 = vmatprep.subr.mxu0 0.0
        %553 = vmatpush1.msra.mxu0 0.0
        %554 = vmatprep.subr.mxu0 0.0
        %555 = vmatpush1.msra.mxu0 0.0
        %556 = vmatprep.subr.mxu0 0.0
        %557 = vmatpush1.msra.mxu0 0.0
        %558 = vmatprep.subr.mxu0 0.0
        %559 = vmatpush1.msra.mxu0 0.0
        %560 = vmatprep.subr.mxu0 0.0
        %561 = vmatpush1.msra.mxu0 0.0
        %562 = vmatprep.subr.mxu0 0.0
        %563 = vmatpush1.msra.mxu0 %v528
        %564 = vmatprep.subr.mxu0 0.0
        %565 = vmatpush2.msra.mxu0 0.0
        %566 = vmatprep.subr.mxu0 0.0
        %567 = vmatpush2.msra.mxu0 0.0
        %568 = vmatprep.subr.mxu0 0.0
        %569 = vmatpush2.msra.mxu0 0.0
        %570 = vmatprep.subr.mxu0 0.0
        %571 = vmatpush2.msra.mxu0 0.0
        %572 = vmatprep.subr.mxu0 0.0
        %573 = vmatpush2.msra.mxu0 0.0
        %574 = vmatprep.subr.mxu0 0.0
        %575 = vmatpush2.msra.mxu0 0.0
        %576 = vmatprep.subr.mxu0 0.0
        %577 = vmatpush2.msra.mxu0 0.0
        %578 = vmatprep.subr.mxu0 0.0
        %579 = vmatpush2.msra.mxu0 0.0
        %580 = vmatprep.subr.mxu0 0.0
        %581 = vmatpush2.msra.mxu0 0.0
        %582 = vmatprep.subr.mxu0 0.0
        %583 = vmatpush2.msra.mxu0 0.0
        %584 = vmatprep.subr.mxu0 0.0
        %585 = vmatpush2.msra.mxu0 0.0
        %586 = vmatprep.subr.mxu0 0.0
        %587 = vmatpush2.msra.mxu0 0.0
        %588 = vmatprep.subr.mxu0 0.0
        %589 = vmatpush2.msra.mxu0 0.0
        %590 = vmatprep.subr.mxu0 0.0
        %591 = vmatpush2.msra.mxu0 0.0
        %592 = vmatprep.subr.mxu0 0.0
        %593 = vmatpush2.msra.mxu0 0.0
        %594 = vmatprep.subr.mxu0 0.0
        %595 = vmatpush2.msra.mxu0 0.0
        %596 = vmatprep.mubr.f32.mxu0 0.0
        %597 = vmatmul.mubr.f32.gmra.mxu0 %v530
        %v598 = vpop.f32.mrf.mxu0
        %v599 = vadd.f32 0.0, %v598
        %v600 = vpop.f32.mrf.mxu0
        %601 = vdwg.mxu0
        %602 = vst.msk [vmem:[%s307] sm:$0xff] %vm444, %v599
        %v603 = vld [vmem:[#allocation3] sm:$0xff]
        %v604 = vld [vmem:[#allocation2 + $0x8] sm:$0xff]
        %606 = vrot.lane.b32.xlu0 %v603, 120
        %v607 = vpop.permute.xlu0 %606
        %v608 = vsel %vm444, %v607, 0
        %610 = vmatprep.subr.mxu0 0.0
        %611 = vmatpush1.msra.mxu0 0.0
        %612 = vmatprep.subr.mxu0 0.0
        %613 = vmatpush1.msra.mxu0 0.0
        %614 = vmatprep.subr.mxu0 0.0
        %615 = vmatpush1.msra.mxu0 0.0
        %616 = vmatprep.subr.mxu0 0.0
        %617 = vmatpush1.msra.mxu0 0.0
        %618 = vmatprep.subr.mxu0 0.0
        %619 = vmatpush1.msra.mxu0 0.0
        %620 = vmatprep.subr.mxu0 0.0
        %621 = vmatpush1.msra.mxu0 0.0
        %622 = vmatprep.subr.mxu0 0.0
        %623 = vmatpush1.msra.mxu0 0.0
        %624 = vmatprep.subr.mxu0 0.0
        %625 = vmatpush1.msra.mxu0 0.0
        %626 = vmatprep.subr.mxu0 0.0
        %627 = vmatpush1.msra.mxu0 0.0
        %628 = vmatprep.subr.mxu0 0.0
        %629 = vmatpush1.msra.mxu0 0.0
        %630 = vmatprep.subr.mxu0 0.0
        %631 = vmatpush1.msra.mxu0 0.0
        %632 = vmatprep.subr.mxu0 0.0
        %633 = vmatpush1.msra.mxu0 0.0
        %634 = vmatprep.subr.mxu0 0.0
        %635 = vmatpush1.msra.mxu0 0.0
        %636 = vmatprep.subr.mxu0 0.0
        %637 = vmatpush1.msra.mxu0 0.0
        %638 = vmatprep.subr.mxu0 0.0
        %639 = vmatpush1.msra.mxu0 0.0
        %640 = vmatprep.subr.mxu0 0.0
        %641 = vmatpush1.msra.mxu0 %v604
        %642 = vmatprep.subr.mxu0 0.0
        %643 = vmatpush2.msra.mxu0 0.0
        %644 = vmatprep.subr.mxu0 0.0
        %645 = vmatpush2.msra.mxu0 0.0
        %646 = vmatprep.subr.mxu0 0.0
        %647 = vmatpush2.msra.mxu0 0.0
        %648 = vmatprep.subr.mxu0 0.0
        %649 = vmatpush2.msra.mxu0 0.0
        %650 = vmatprep.subr.mxu0 0.0
        %651 = vmatpush2.msra.mxu0 0.0
        %652 = vmatprep.subr.mxu0 0.0
        %653 = vmatpush2.msra.mxu0 0.0
        %654 = vmatprep.subr.mxu0 0.0
        %655 = vmatpush2.msra.mxu0 0.0
        %656 = vmatprep.subr.mxu0 0.0
        %657 = vmatpush2.msra.mxu0 0.0
        %658 = vmatprep.subr.mxu0 0.0
        %659 = vmatpush2.msra.mxu0 0.0
        %660 = vmatprep.subr.mxu0 0.0
        %661 = vmatpush2.msra.mxu0 0.0
        %662 = vmatprep.subr.mxu0 0.0
        %663 = vmatpush2.msra.mxu0 0.0
        %664 = vmatprep.subr.mxu0 0.0
        %665 = vmatpush2.msra.mxu0 0.0
        %666 = vmatprep.subr.mxu0 0.0
        %667 = vmatpush2.msra.mxu0 0.0
        %668 = vmatprep.subr.mxu0 0.0
        %669 = vmatpush2.msra.mxu0 0.0
        %670 = vmatprep.subr.mxu0 0.0
        %671 = vmatpush2.msra.mxu0 0.0
        %672 = vmatprep.subr.mxu0 0.0
        %673 = vmatpush2.msra.mxu0 0.0
        %674 = vmatprep.mubr.f32.mxu0 0.0
        %675 = vmatmul.mubr.f32.gmra.mxu0 %v608
        %v676 = vpop.f32.mrf.mxu0
        %v677 = vadd.f32 0.0, %v676
        %v678 = vpop.f32.mrf.mxu0
        %679 = vdwg.mxu0
        %s680 = scalar_lea.vmem %s307, 8 [#allocation12]
        %681 = vst.msk [vmem:[%s680] sm:$0xff] %vm444, %v677
        %v682 = vld [vmem:[#allocation3] sm:$0xff]
        %v683 = vld [vmem:[#allocation2 + $0x10] sm:$0xff]
        %685 = vrot.lane.b32.xlu0 %v682, 112
        %v686 = vpop.permute.xlu0 %685
        %v687 = vsel %vm444, %v686, 0
        %689 = vmatprep.subr.mxu0 0.0
        %690 = vmatpush1.msra.mxu0 0.0
        %691 = vmatprep.subr.mxu0 0.0
        %692 = vmatpush1.msra.mxu0 0.0
        %693 = vmatprep.subr.mxu0 0.0
        %694 = vmatpush1.msra.mxu0 0.0
        %695 = vmatprep.subr.mxu0 0.0
        %696 = vmatpush1.msra.mxu0 0.0
        %697 = vmatprep.subr.mxu0 0.0
        %698 = vmatpush1.msra.mxu0 0.0
        %699 = vmatprep.subr.mxu0 0.0
        %700 = vmatpush1.msra.mxu0 0.0
        %701 = vmatprep.subr.mxu0 0.0
        %702 = vmatpush1.msra.mxu0 0.0
        %703 = vmatprep.subr.mxu0 0.0
        %704 = vmatpush1.msra.mxu0 0.0
        %705 = vmatprep.subr.mxu0 0.0
        %706 = vmatpush1.msra.mxu0 0.0
        %707 = vmatprep.subr.mxu0 0.0
        %708 = vmatpush1.msra.mxu0 0.0
        %709 = vmatprep.subr.mxu0 0.0
        %710 = vmatpush1.msra.mxu0 0.0
        %711 = vmatprep.subr.mxu0 0.0
        %712 = vmatpush1.msra.mxu0 0.0
        %713 = vmatprep.subr.mxu0 0.0
        %714 = vmatpush1.msra.mxu0 0.0
        %715 = vmatprep.subr.mxu0 0.0
        %716 = vmatpush1.msra.mxu0 0.0
        %717 = vmatprep.subr.mxu0 0.0
        %718 = vmatpush1.msra.mxu0 0.0
        %719 = vmatprep.subr.mxu0 0.0
        %720 = vmatpush1.msra.mxu0 %v683
        %721 = vmatprep.subr.mxu0 0.0
        %722 = vmatpush2.msra.mxu0 0.0
        %723 = vmatprep.subr.mxu0 0.0
        %724 = vmatpush2.msra.mxu0 0.0
        %725 = vmatprep.subr.mxu0 0.0
        %726 = vmatpush2.msra.mxu0 0.0
        %727 = vmatprep.subr.mxu0 0.0
        %728 = vmatpush2.msra.mxu0 0.0
        %729 = vmatprep.subr.mxu0 0.0
        %730 = vmatpush2.msra.mxu0 0.0
        %731 = vmatprep.subr.mxu0 0.0
        %732 = vmatpush2.msra.mxu0 0.0
        %733 = vmatprep.subr.mxu0 0.0
        %734 = vmatpush2.msra.mxu0 0.0
        %735 = vmatprep.subr.mxu0 0.0
        %736 = vmatpush2.msra.mxu0 0.0
        %737 = vmatprep.subr.mxu0 0.0
        %738 = vmatpush2.msra.mxu0 0.0
        %739 = vmatprep.subr.mxu0 0.0
        %740 = vmatpush2.msra.mxu0 0.0
        %741 = vmatprep.subr.mxu0 0.0
        %742 = vmatpush2.msra.mxu0 0.0
        %743 = vmatprep.subr.mxu0 0.0
        %744 = vmatpush2.msra.mxu0 0.0
        %745 = vmatprep.subr.mxu0 0.0
        %746 = vmatpush2.msra.mxu0 0.0
        %747 = vmatprep.subr.mxu0 0.0
        %748 = vmatpush2.msra.mxu0 0.0
        %749 = vmatprep.subr.mxu0 0.0
        %750 = vmatpush2.msra.mxu0 0.0
        %751 = vmatprep.subr.mxu0 0.0
        %752 = vmatpush2.msra.mxu0 0.0
        %753 = vmatprep.mubr.f32.mxu0 0.0
        %754 = vmatmul.mubr.f32.gmra.mxu0 %v687
        %v755 = vpop.f32.mrf.mxu0
        %v756 = vadd.f32 0.0, %v755
        %v757 = vpop.f32.mrf.mxu0
        %758 = vdwg.mxu0
        %s759 = scalar_lea.vmem %s307, 16 [#allocation12]
        %760 = vst.msk [vmem:[%s759] sm:$0xff] %vm444, %v756
        %v761 = vld [vmem:[#allocation3] sm:$0xff]
        %v762 = vld [vmem:[#allocation2 + $0x18] sm:$0xff]
        %764 = vrot.lane.b32.xlu0 %v761, 104
        %v765 = vpop.permute.xlu0 %764
        %v766 = vsel %vm444, %v765, 0
        %768 = vmatprep.subr.mxu0 0.0
        %769 = vmatpush1.msra.mxu0 0.0
        %770 = vmatprep.subr.mxu0 0.0
        %771 = vmatpush1.msra.mxu0 0.0
        %772 = vmatprep.subr.mxu0 0.0
        %773 = vmatpush1.msra.mxu0 0.0
        %774 = vmatprep.subr.mxu0 0.0
        %775 = vmatpush1.msra.mxu0 0.0
        %776 = vmatprep.subr.mxu0 0.0
        %777 = vmatpush1.msra.mxu0 0.0
        %778 = vmatprep.subr.mxu0 0.0
        %779 = vmatpush1.msra.mxu0 0.0
        %780 = vmatprep.subr.mxu0 0.0
        %781 = vmatpush1.msra.mxu0 0.0
        %782 = vmatprep.subr.mxu0 0.0
        %783 = vmatpush1.msra.mxu0 0.0
        %784 = vmatprep.subr.mxu0 0.0
        %785 = vmatpush1.msra.mxu0 0.0
        %786 = vmatprep.subr.mxu0 0.0
        %787 = vmatpush1.msra.mxu0 0.0
        %788 = vmatprep.subr.mxu0 0.0
        %789 = vmatpush1.msra.mxu0 0.0
        %790 = vmatprep.subr.mxu0 0.0
        %791 = vmatpush1.msra.mxu0 0.0
        %792 = vmatprep.subr.mxu0 0.0
        %793 = vmatpush1.msra.mxu0 0.0
        %794 = vmatprep.subr.mxu0 0.0
        %795 = vmatpush1.msra.mxu0 0.0
        %796 = vmatprep.subr.mxu0 0.0
        %797 = vmatpush1.msra.mxu0 0.0
        %798 = vmatprep.subr.mxu0 0.0
        %799 = vmatpush1.msra.mxu0 %v762
        %800 = vmatprep.subr.mxu0 0.0
        %801 = vmatpush2.msra.mxu0 0.0
        %802 = vmatprep.subr.mxu0 0.0
        %803 = vmatpush2.msra.mxu0 0.0
        %804 = vmatprep.subr.mxu0 0.0
        %805 = vmatpush2.msra.mxu0 0.0
        %806 = vmatprep.subr.mxu0 0.0
        %807 = vmatpush2.msra.mxu0 0.0
        %808 = vmatprep.subr.mxu0 0.0
        %809 = vmatpush2.msra.mxu0 0.0
        %810 = vmatprep.subr.mxu0 0.0
        %811 = vmatpush2.msra.mxu0 0.0
        %812 = vmatprep.subr.mxu0 0.0
        %813 = vmatpush2.msra.mxu0 0.0
        %814 = vmatprep.subr.mxu0 0.0
        %815 = vmatpush2.msra.mxu0 0.0
        %816 = vmatprep.subr.mxu0 0.0
        %817 = vmatpush2.msra.mxu0 0.0
        %818 = vmatprep.subr.mxu0 0.0
        %819 = vmatpush2.msra.mxu0 0.0
        %820 = vmatprep.subr.mxu0 0.0
        %821 = vmatpush2.msra.mxu0 0.0
        %822 = vmatprep.subr.mxu0 0.0
        %823 = vmatpush2.msra.mxu0 0.0
        %824 = vmatprep.subr.mxu0 0.0
        %825 = vmatpush2.msra.mxu0 0.0
        %826 = vmatprep.subr.mxu0 0.0
        %827 = vmatpush2.msra.mxu0 0.0
        %828 = vmatprep.subr.mxu0 0.0
        %829 = vmatpush2.msra.mxu0 0.0
        %830 = vmatprep.subr.mxu0 0.0
        %831 = vmatpush2.msra.mxu0 0.0
        %832 = vmatprep.mubr.f32.mxu0 0.0
        %833 = vmatmul.mubr.f32.gmra.mxu0 %v766
        %v834 = vpop.f32.mrf.mxu0
        %v835 = vadd.f32 0.0, %v834
        %v836 = vpop.f32.mrf.mxu0
        %837 = vdwg.mxu0
        %s838 = scalar_lea.vmem %s307, 24 [#allocation12]
        %839 = vst.msk [vmem:[%s838] sm:$0xff] %vm444, %v835
        %s840 = sand.u32 %s154, 1
        %s841 = scalar_lea.sflag [#allocation6], %s840
        %s842 = sand.u32 %s154, 1
        %s843 = smul.addr %s842, 32
        %s844 = scalar_lea.vmem [#allocation12], %s843
        // Predicated region
        $region53: #{tpu_custom_call.1} parent=35 // pred_check
          %p845 = pneg %p164
        $region54: #{tpu_custom_call.1} parent=35 // pred_check_branch
          %847 = sbr.rel (%p845) target = $region56
        $region55: #{tpu_custom_call.1} parent=35 // pred_region
          %s849 = ssub.s32 512, 512
          %850 = vsyncadd %s841, %s849
          %s851 = sadd.s32 %s31, %s32
          %s852 = sadd.s32 %s851, %s30
          %s853 = smul.addr %s852, 128
          %s854 = scalar_lea.hbm %s4, %s853
          %s855 = sshll.u32 %s844, 4
          %s856 = int_to_ptr.vmem [resolvable:$true] %s855
          %861 = dma.vmem_to_hbm [thread:$0]  %s856, 512, %s854, %s841, 128, 256, 8
        $region56: #{tpu_custom_call.1} parent=35 // pred_fallthru
          _
      $region36: #{tpu_custom_call.1} parent=5 // pred_fallthru
        _
      %p862 = scmp.le.s32.totalorder 2, %s20
      // Predicated region
      $region57: #{tpu_custom_call.1} parent=5 // pred_check
        %p863 = pneg %p862
      $region58: #{tpu_custom_call.1} parent=5 // pred_check_branch
        %865 = sbr.rel (%p863) target = $region60
      $region59: #{tpu_custom_call.1} parent=5 // pred_region
        %s866 = ssub.s32 %s20, 2
        // Predicated region
        $region61: #{tpu_custom_call.1} parent=59 // pred_check
          %p867 = pneg %p170
        $region62: #{tpu_custom_call.1} parent=59 // pred_check_branch
          %869 = sbr.rel (%p867) target = $region64
        $region63: #{tpu_custom_call.1} parent=59 // pred_region
          %s870 = sand.u32 %s155, 1
          %s871 = scalar_lea.sflag [#allocation6], %s870
          %s872 = sand.u32 %s155, 1
          %s873 = smul.addr %s872, 32
          %s874 = scalar_lea.vmem [#allocation12], %s873
          %875 = dma.done %s871, 512
        $region64: #{tpu_custom_call.1} parent=59 // pred_fallthru
          _
      $region60: #{tpu_custom_call.1} parent=5 // pred_fallthru
        _
    $region6: #{tpu_custom_call.1} parent=1 // loop_footer
      %s24 = sadd.s32 1, %s20
    $region7: #{tpu_custom_call.1} parent=1 // loop_footer_branch
      %19 = sbr.rel target = $region3
    $region8: #{tpu_custom_call.1} parent=1 // loop_exit
      _
    %876 = vsyncpa [#allocation5], 1
    %s877 = scalar_lea.sflag [#allocation5], 1
    %878 = vsyncpa %s877, 1
    %879 = vsyncpa [#allocation8], 1
    %s880 = scalar_lea.sflag [#allocation8], 1
    %881 = vsyncpa %s880, 1
    %882 = vsyncpa [#allocation11], 1
    %883 = vsyncpa [#allocation6], 1
    %s884 = scalar_lea.sflag [#allocation6], 1
    %885 = vsyncpa %s884, 1

</llo_original>
